<compile_context>
chip_gen: v7x
topology: tpu7x:2x2x1
jax: 0.10.0
libtpu: 0.0.40
codegen_flags: <defaults>
</compile_context>

<pallas_src>
import functools

import jax
import jax.numpy as jnp
import numpy as np
from jax.experimental import pallas as pl
from jax.experimental.pallas import tpu as pltpu


def _qconv3d_kernel(x_ref, w_ref, b_ref, o_ref, *, requant_mult):
    """(tm, K) int8 patches x (K, tn) bf16 weights -> (tm, tn) quint8 outputs."""
    x = x_ref[...].astype(jnp.bfloat16)                      # small ints: exact in bf16
    acc = jnp.dot(x, w_ref[...], preferred_element_type=jnp.float32)
    y = acc * requant_mult + b_ref[...]                      # folded zp/bias/requant
    y = jnp.clip(jnp.round(y), 0.0, 255.0)                   # quint8 range
    o_ref[...] = y.astype(jnp.int32).astype(jnp.uint8)


def _im2col_3d(x, kernel_size, stride, dilation, out_spatial):
    """x: (N, C, Dp, Hp, Wp), already padded. Returns (N*Do*Ho*Wo, C*kD*kH*kW), x.dtype."""
    N, C = x.shape[0], x.shape[1]
    kD, kH, kW = kernel_size
    sD, sH, sW = stride
    dD, dH, dW = dilation
    Do, Ho, Wo = out_spatial
    cols = []
    for kd in range(kD):
        for kh in range(kH):
            for kw in range(kW):
                sl = x[:, :,
                       kd * dD: kd * dD + (Do - 1) * sD + 1: sD,
                       kh * dH: kh * dH + (Ho - 1) * sH + 1: sH,
                       kw * dW: kw * dW + (Wo - 1) * sW + 1: sW]
                cols.append(sl)                               # (N, C, Do, Ho, Wo)
    patches = jnp.stack(cols, axis=0)                         # (kDHW, N, C, Do, Ho, Wo)
    patches = patches.transpose(1, 3, 4, 5, 2, 0)             # (N, Do, Ho, Wo, C, kDHW)
    return patches.reshape(N * Do * Ho * Wo, C * kD * kH * kW)


@functools.partial(jax.jit, static_argnums=tuple(range(3, 12)),
                   static_argnames=("tm", "tn"))
def quantized_conv3d(x_q, w_q, bias, x_scale, x_zp, w_scale, out_scale, out_zp,
                     stride, padding, dilation, groups=1, *, tm=512, tn=128):
    assert groups == 1  # TODO(synk): grouped quantized conv3d not implemented
    N, C, D, H, W = x_q.shape
    O = w_q.shape[0]
    kD, kH, kW = w_q.shape[2], w_q.shape[3], w_q.shape[4]
    sD, sH, sW = stride
    pD, pH, pW = padding
    dD, dH, dW = dilation

    Do = (D + 2 * pD - dD * (kD - 1) - 1) // sD + 1
    Ho = (H + 2 * pH - dH * (kH - 1) - 1) // sH + 1
    Wo = (W + 2 * pW - dW * (kW - 1) - 1) // sW + 1

    # Shift to the signed int8 domain (x_q - 128).  Zero-padding in the quantized
    # domain pads with x_zp, i.e. (x_zp - 128) after the shift.
    x_s8 = (x_q.astype(jnp.int32) - 128).astype(jnp.int8)
    x_s8 = jnp.pad(x_s8, ((0, 0), (0, 0), (pD, pD), (pH, pH), (pW, pW)),
                   constant_values=np.int8(int(x_zp) - 128))

    patches = _im2col_3d(x_s8, (kD, kH, kW), stride, dilation, (Do, Ho, Wo))  # (M, K) i8
    M, K = patches.shape

    M_pad = pl.cdiv(M, tm) * tm
    K_pad = pl.cdiv(K, 128) * 128
    O_pad = pl.cdiv(O, tn) * tn
    patches = jnp.pad(patches, ((0, M_pad - M), (0, K_pad - K)))

    # (K, O) bf16 weight matrix (small integers -> exact in bf16), zero-padded.
    w_mat = w_q.reshape(O, -1).T.astype(jnp.bfloat16)
    w_mat = jnp.pad(w_mat, ((0, K_pad - K), (0, O_pad - O)))

    # Fold all requant constants: one multiplier + one per-channel bias vector.
    #   conv_int = sum_k (x_s8 - (x_zp-128)) * w = acc - (x_zp-128) * sum_k(w)
    requant_mult = float(x_scale) * float(w_scale) / float(out_scale)
    sum_w = w_q.reshape(O, -1).astype(jnp.float32).sum(axis=1)
    bias_fold = (bias.astype(jnp.float32) / float(out_scale) + float(out_zp)
                 - float(int(x_zp) - 128) * sum_w * requant_mult)
    bias_fold = jnp.pad(bias_fold, (0, O_pad - O)).reshape(1, O_pad)

    kernel = functools.partial(_qconv3d_kernel, requant_mult=requant_mult)

    # VMEM budget: double-buffered int8 patch tile + bf16 weight tile + u8 output.
    tile_bytes = tm * K_pad + K_pad * tn * 2 + tn * 4 + tm * tn
    vmem_limit = int(min(max(4 * tile_bytes, 32 * 1024 * 1024), 64 * 1024 * 1024))

    out = pl.pallas_call(
        kernel,
        out_shape=jax.ShapeDtypeStruct((M_pad, O_pad), jnp.uint8),
        grid=(M_pad // tm, O_pad // tn),
        in_specs=[
            pl.BlockSpec((tm, K_pad), lambda i, j: (i, 0)),   # int8 patch rows
            pl.BlockSpec((K_pad, tn), lambda i, j: (0, j)),   # bf16 weight columns
            pl.BlockSpec((1, tn), lambda i, j: (0, j)),       # folded bias vector
        ],
        out_specs=pl.BlockSpec((tm, tn), lambda i, j: (i, j)),
        compiler_params=pltpu.CompilerParams(
            dimension_semantics=("parallel", "parallel"),
            vmem_limit_bytes=vmem_limit),
    )(patches, w_mat, bias_fold)

    out = out[:M, :O]
    # (M, O) -> (N, Do, Ho, Wo, O) -> NCDHW (N, O, Do, Ho, Wo)
    return out.reshape(N, Do, Ho, Wo, O).transpose(0, 4, 1, 2, 3)


if __name__ == "__main__":
    key = jax.random.PRNGKey(0)
    k1, k2, k3 = jax.random.split(key, 3)

    # Shapes consistent with Conv3d(in_channels=4, out_channels=8, kernel_size=3,
    # stride=1, padding=1), input (N, C, D, H, W) = (2, 4, 8, 8, 8).
    N, Cin, Cout = 2, 4, 8
    D = H = W = 8
    ksize, stride, padding, dilation, groups = (3, 3, 3), (1, 1, 1), (1, 1, 1), (1, 1, 1), 1

    # quint8 input params (x_zp != 128 to exercise the zero-point fold),
    # qint8 weight params, quint8 output params.
    x_scale, x_zp = 0.05, 121
    w_scale = 0.02
    out_scale, out_zp = 0.1, 64

    x_q = jax.random.randint(k1, (N, Cin, D, H, W), 0, 256, dtype=jnp.int32).astype(jnp.uint8)
    w_q = jax.random.randint(k2, (Cout, Cin // groups) + ksize, -127, 128,
                             dtype=jnp.int32).astype(jnp.int8)
    bias = jax.random.normal(k3, (Cout,), dtype=jnp.float32) * 0.1

    y = quantized_conv3d(x_q, w_q, bias, x_scale, x_zp, w_scale, out_scale, out_zp,
                         stride, padding, dilation, groups)
    y = jax.block_until_ready(y)

    # Pure-JAX reference of the same quantized-conv formula (sanity check).
    pD, pH, pW = padding
    Do = Ho = Wo = 8
    x_c = x_q.astype(jnp.float32) - float(x_zp)
    x_c = jnp.pad(x_c, ((0, 0), (0, 0), (pD, pD), (pH, pH), (pW, pW)))
    patches_ref = _im2col_3d(x_c, ksize, stride, dilation, (Do, Ho, Wo))
    acc_ref = patches_ref @ w_q.astype(jnp.float32).reshape(Cout, -1).T
    y_ref = jnp.clip(jnp.round(acc_ref * x_scale * w_scale / out_scale
                               + bias / out_scale + out_zp), 0, 255)
    y_ref = y_ref.astype(jnp.uint8).reshape(N, Do, Ho, Wo, Cout).transpose(0, 4, 1, 2, 3)

    diff = np.abs(np.asarray(y, np.int32) - np.asarray(y_ref, np.int32))
    assert y.shape == (N, Cout, Do, Ho, Wo) and y.dtype == jnp.uint8
    assert diff.max() <= 1, f"max quantized mismatch {diff.max()}"
    print("KERNEL_OK")
</pallas_src>

<mosaic_0001>
module attributes {stable_mosaic.version = 11 : i64} {
  func.func @_qconv3d_kernel(%arg0: i32, %arg1: i32, %arg2: memref<512x128xi8, #tpu.memory_space<vmem>>, %arg3: memref<128x128xbf16, #tpu.memory_space<vmem>>, %arg4: memref<1x128xf32, #tpu.memory_space<vmem>>, %arg5: memref<512x128xi8, #tpu.memory_space<vmem>>) attributes {dimension_semantics = [#tpu.dimension_semantics<parallel>, #tpu.dimension_semantics<parallel>], iteration_bounds = array<i64: 2, 1>, scalar_prefetch = 0 : i64, scratch_operands = 0 : i64, tpu.core_type = #tpu.core_type<tc>, window_params = [{transform_indices = @transform_0, window_bounds = array<i64: 512, 128>}, {transform_indices = @transform_1, window_bounds = array<i64: 128, 128>}, {transform_indices = @transform_2, window_bounds = array<i64: 1, 128>}, {transform_indices = @transform_3, window_bounds = array<i64: 512, 128>}]} {
    %c0 = arith.constant 0 : index
    %c0_0 = arith.constant 0 : index
    %0 = vector.load %arg2[%c0, %c0_0] : memref<512x128xi8, #tpu.memory_space<vmem>>, vector<512x128xi8>
    %1 = arith.sitofp %0 : vector<512x128xi8> to vector<512x128xbf16>
    %c0_1 = arith.constant 0 : index
    %c0_2 = arith.constant 0 : index
    %2 = vector.load %arg3[%c0_1, %c0_2] : memref<128x128xbf16, #tpu.memory_space<vmem>>, vector<128x128xbf16>
    %cst = arith.constant dense<0.000000e+00> : vector<512x128xf32>
    %3 = tpu.matmul %1, %2, %cst {dimension_numbers = #tpu.dot_dimension_numbers<[1], [0], [0], [1], [0, 0, 1, 1], [], []>} : vector<512x128xbf16>, vector<128x128xbf16>, vector<512x128xf32> -> vector<512x128xf32>
    %cst_3 = arith.constant 0.00999999977 : f32
    %4 = vector.broadcast %cst_3 : f32 to vector<512x128xf32>
    %5 = arith.mulf %3, %4 : vector<512x128xf32>
    %c0_4 = arith.constant 0 : index
    %c0_5 = arith.constant 0 : index
    %6 = vector.load %arg4[%c0_4, %c0_5] : memref<1x128xf32, #tpu.memory_space<vmem>>, vector<1x128xf32>
    %7 = vector.broadcast %6 : vector<1x128xf32> to vector<512x128xf32>
    %8 = arith.addf %5, %7 : vector<512x128xf32>
    %9 = math.roundeven %8 : vector<512x128xf32>
    %cst_6 = arith.constant 0.000000e+00 : f32
    %cst_7 = arith.constant 2.550000e+02 : f32
    %10 = vector.broadcast %cst_6 : f32 to vector<512x128xf32>
    %11 = arith.maximumf %10, %9 : vector<512x128xf32>
    %12 = vector.broadcast %cst_7 : f32 to vector<512x128xf32>
    %13 = arith.minimumf %12, %11 : vector<512x128xf32>
    %14 = arith.fptosi %13 : vector<512x128xf32> to vector<512x128xi32>
    %15 = arith.trunci %14 : vector<512x128xi32> to vector<512x128xi8>
    %c0_8 = arith.constant 0 : index
    %c0_9 = arith.constant 0 : index
    %16 = vector.load %arg5[%c0_8, %c0_9] : memref<512x128xi8, #tpu.memory_space<vmem>>, vector<512x128xi8>
    tpu.vector_store %arg5[%c0_8, %c0_9], %15 {strides = array<i32>} : memref<512x128xi8, #tpu.memory_space<vmem>>, vector<512x128xi8>,
    return
  }
  func.func @transform_0(%arg0: i32, %arg1: i32) -> (i32, i32) {
    %c0_i32 = arith.constant 0 : i32
    %c0_i32_0 = arith.constant 0 : i32
    return %arg0, %c0_i32 : i32, i32
  }
  func.func @transform_1(%arg0: i32, %arg1: i32) -> (i32, i32) {
    %c0_i32 = arith.constant 0 : i32
    %c0_i32_0 = arith.constant 0 : i32
    return %c0_i32, %arg1 : i32, i32
  }
  func.func @transform_2(%arg0: i32, %arg1: i32) -> (i32, i32) {
    %c0_i32 = arith.constant 0 : i32
    %c0_i32_0 = arith.constant 0 : i32
    return %c0_i32, %arg1 : i32, i32
  }
  func.func @transform_3(%arg0: i32, %arg1: i32) -> (i32, i32) {
    %c0_i32 = arith.constant 0 : i32
    return %arg0, %arg1 : i32, i32
  }
}

</mosaic_0001>

<llo_original>
// kernel: quantized_conv3d.1
$region0: #{quantized_conv3d.1}
  #allocation0 [shape = 'u32[]', space=smem, size = 0x4, offset = 0x4, fixed_abs, tag = 'smem constant byte address 0x4 - core index']
  #allocation1 [shape = 'u32[144,128]{1,0:T(1,128)}', space=vmem, size = 0x12000, scoped, tag = 'internal scratch']
  %s0 = inlined_call_operand.vmem [shape: s8[1024,128], index: 0, kind: input, shape index: {}]
  %s1 = inlined_call_operand.vmem [shape: bf16[128,128], index: 1, kind: input, shape index: {}]
  %s2 = inlined_call_operand.vmem [shape: f32[1,128], index: 2, kind: input, shape index: {}]
  %s3 = inlined_call_operand.vmem [shape: u8[1024,128], index: 3, kind: output, shape index: {}]
  %s4 = sld [smem:[#allocation0]]
  $region45: #{quantized_conv3d.1} parent=0
    _
  %s6 = ssub.s32 1, %s4
  %s7 = scalar_select 0, %s6, %s4
  loop: start=0, step=1, limit=4
  $region2: #{quantized_conv3d.1} parent=0 // loop_pre_header
    _
  $region3: #{quantized_conv3d.1} parent=0 // loop_header
    %s9 = sphi 0, %s13
    %p10 = scmp.ge.s32.totalorder %s9, 4
    %s16 = sphi 0, %s28
    %s17 = sphi 0, %s24
    %s18 = sphi 0, %s16
    %s19 = sphi 0, %s17
    %s20 = sphi 0, %s18
    %s21 = sphi 0, %s19
    %s31 = sphi 0, %s33
    %s34 = sphi 0, %s31
    %s35 = sphi 0, %s34
    %s51 = sphi 0, %s35
    %s57 = sphi 0, %s59
    %s60 = sphi 0, %s57
    %s61 = sphi 0, %s60
    %s77 = sphi 0, %s61
    %s83 = sphi 0, %s85
    %s86 = sphi 0, %s83
    %s87 = sphi 0, %s86
    %s103 = sphi 0, %s87
    %s111 = sphi 0, %s113
    %s114 = sphi 0, %s111
    %s115 = sphi 0, %s114
    %s131 = sphi 0, %s115
  $region4: #{quantized_conv3d.1} parent=0 // loop_header_branch
    %12 = sbr.rel (%p10) target = $region8
  $region5: #{quantized_conv3d.1} parent=0 // loop_body
    %s14 = ssub.s32 %s9, 1
    %s15 = ssub.s32 %s9, 2
    %s22 = sadd.s32 1, %s17
    %p23 = scmp.ge.s32.totalorder %s22, 1
    %s24 = scalar_select %p23, 0, %s22
    %s25 = sadd.s32 1, %s16
    %s26 = scalar_select %p23, %s25, %s16
    %p27 = scmp.ge.s32.totalorder %s26, 2
    %s28 = scalar_select %p27, 0, %s26
    %s29 = ssub.s32 %s16, %s28
    %p30 = scmp.eq.s32.totalorder %s29, 0
    %s32 = sadd.s32 %s31, 1
    %s33 = scalar_select %p30, %s31, %s32
    %p36 = pneg %p30
    %p37 = scmp.eq.s32.totalorder %s9, 1
    %p38 = por %p36, %p37
    %p39 = scmp.ne.s32.totalorder %s31, %s34
    %p40 = scmp.eq.s32.totalorder %s9, 0
    %p41 = por %p39, %p40
    %p42 = scmp.ne.s32.totalorder %s31, %s34
    %p43 = scmp.eq.s32.totalorder %s14, 1
    %p44 = por %p42, %p43
    %p45 = scmp.ne.s32.totalorder %s34, %s35
    %p46 = scmp.eq.s32.totalorder %s14, 0
    %p47 = por %p45, %p46
    %p48 = scmp.ne.s32.totalorder %s34, %s35
    %p49 = scmp.eq.s32.totalorder %s15, 1
    %p50 = por %p48, %p49
    %p52 = scmp.ne.s32.totalorder %s35, %s51
    %p53 = scmp.eq.s32.totalorder %s15, 0
    %p54 = por %p52, %p53
    %s55 = ssub.s32 %s17, %s24
    %p56 = scmp.eq.s32.totalorder %s55, 0
    %s58 = sadd.s32 %s57, 1
    %s59 = scalar_select %p56, %s57, %s58
    %p62 = pneg %p56
    %p63 = scmp.eq.s32.totalorder %s9, 1
    %p64 = por %p62, %p63
    %p65 = scmp.ne.s32.totalorder %s57, %s60
    %p66 = scmp.eq.s32.totalorder %s9, 0
    %p67 = por %p65, %p66
    %p68 = scmp.ne.s32.totalorder %s57, %s60
    %p69 = scmp.eq.s32.totalorder %s14, 1
    %p70 = por %p68, %p69
    %p71 = scmp.ne.s32.totalorder %s60, %s61
    %p72 = scmp.eq.s32.totalorder %s14, 0
    %p73 = por %p71, %p72
    %p74 = scmp.ne.s32.totalorder %s60, %s61
    %p75 = scmp.eq.s32.totalorder %s15, 1
    %p76 = por %p74, %p75
    %p78 = scmp.ne.s32.totalorder %s61, %s77
    %p79 = scmp.eq.s32.totalorder %s15, 0
    %p80 = por %p78, %p79
    %s81 = ssub.s32 %s17, %s24
    %p82 = scmp.eq.s32.totalorder %s81, 0
    %s84 = sadd.s32 %s83, 1
    %s85 = scalar_select %p82, %s83, %s84
    %p88 = pneg %p82
    %p89 = scmp.eq.s32.totalorder %s9, 1
    %p90 = por %p88, %p89
    %p91 = scmp.ne.s32.totalorder %s83, %s86
    %p92 = scmp.eq.s32.totalorder %s9, 0
    %p93 = por %p91, %p92
    %p94 = scmp.ne.s32.totalorder %s83, %s86
    %p95 = scmp.eq.s32.totalorder %s14, 1
    %p96 = por %p94, %p95
    %p97 = scmp.ne.s32.totalorder %s86, %s87
    %p98 = scmp.eq.s32.totalorder %s14, 0
    %p99 = por %p97, %p98
    %p100 = scmp.ne.s32.totalorder %s86, %s87
    %p101 = scmp.eq.s32.totalorder %s15, 1
    %p102 = por %p100, %p101
    %p104 = scmp.ne.s32.totalorder %s87, %s103
    %p105 = scmp.eq.s32.totalorder %s15, 0
    %p106 = por %p104, %p105
    %s107 = ssub.s32 %s16, %s28
    %s108 = ssub.s32 %s17, %s24
    %s109 = sor.u32 %s107, %s108
    %p110 = scmp.eq.s32.totalorder %s109, 0
    %s112 = sadd.s32 %s111, 1
    %s113 = scalar_select %p110, %s111, %s112
    %p116 = pneg %p110
    %p117 = scmp.eq.s32.totalorder %s9, 1
    %p118 = por %p116, %p117
    %p119 = scmp.ne.s32.totalorder %s111, %s114
    %p120 = scmp.eq.s32.totalorder %s9, 0
    %p121 = por %p119, %p120
    %p122 = scmp.ne.s32.totalorder %s111, %s114
    %p123 = scmp.eq.s32.totalorder %s14, 1
    %p124 = por %p122, %p123
    %p125 = scmp.ne.s32.totalorder %s114, %s115
    %p126 = scmp.eq.s32.totalorder %s14, 0
    %p127 = por %p125, %p126
    %p128 = scmp.ne.s32.totalorder %s114, %s115
    %p129 = scmp.eq.s32.totalorder %s15, 1
    %p130 = por %p128, %p129
    %p132 = scmp.ne.s32.totalorder %s115, %s131
    %p133 = scmp.eq.s32.totalorder %s15, 0
    %p134 = por %p132, %p133
    %p135 = scmp.le.s32.totalorder 1, %s9
    %p136 = scmp.lt.s32.totalorder %s9, 3
    %p137 = pnand %p135, %p136
    %p138 = pneg %p137
    // Predicated region
    $region9: #{quantized_conv3d.1} parent=5 // pred_check
      _
    $region10: #{quantized_conv3d.1} parent=5 // pred_check_branch
      %140 = sbr.rel (%p137) target = $region12
    $region11: #{quantized_conv3d.1} parent=5 // pred_region
      %s141 = ssub.s32 %s9, 1
      // Predicated region
      $region13: #{quantized_conv3d.1} parent=11 // pred_check
        %p142 = pneg %p73
      $region14: #{quantized_conv3d.1} parent=11 // pred_check_branch
        %144 = sbr.rel (%p142) target = $region16
      $region15: #{quantized_conv3d.1} parent=11 // pred_region
        %p145 = scmp.lt.s32.totalorder %s19, 0
        %s146 = scalar_select %p145, %s19, 0
        %s147 = smul.addr %s146, 4
        %s148 = scalar_lea.vmem %s1, %s147
      $region16: #{quantized_conv3d.1} parent=11 // pred_fallthru
        _
      // Predicated region
      $region17: #{quantized_conv3d.1} parent=11 // pred_check
        %p149 = pneg %p99
      $region18: #{quantized_conv3d.1} parent=11 // pred_check_branch
        %151 = sbr.rel (%p149) target = $region20
      $region19: #{quantized_conv3d.1} parent=11 // pred_region
        %p152 = scmp.lt.s32.totalorder %s19, 0
        %s153 = scalar_select %p152, %s19, 0
        %s154 = scalar_lea.vmem %s2, %s153
      $region20: #{quantized_conv3d.1} parent=11 // pred_fallthru
        _
    $region12: #{quantized_conv3d.1} parent=5 // pred_fallthru
      _
    %p155 = scmp.lt.s32.totalorder %s9, 2
    // Predicated region
    $region21: #{quantized_conv3d.1} parent=5 // pred_check
      %p156 = pneg %p155
    $region22: #{quantized_conv3d.1} parent=5 // pred_check_branch
      %158 = sbr.rel (%p156) target = $region24
    $region23: #{quantized_conv3d.1} parent=5 // pred_region
      // Predicated region
      $region25: #{quantized_conv3d.1} parent=23 // pred_check
        %p159 = pneg %p41
      $region26: #{quantized_conv3d.1} parent=23 // pred_check_branch
        %161 = sbr.rel (%p159) target = $region28
      $region27: #{quantized_conv3d.1} parent=23 // pred_region
        %s162 = smul.u32 16, %s16
        %p163 = scmp.lt.s32.totalorder %s162, 31
        %s164 = scalar_select %p163, %s162, 31
        %s165 = smul.addr %s164, 8
        %s166 = scalar_lea.vmem %s0, %s165
        %s167 = smul.u32 16, %s16
      $region28: #{quantized_conv3d.1} parent=23 // pred_fallthru
        _
    $region24: #{quantized_conv3d.1} parent=5 // pred_fallthru
      _
    %p168 = scmp.le.s32.totalorder 1, %s9
    %p169 = scmp.lt.s32.totalorder %s9, 3
    %p170 = pnand %p168, %p169
    %p171 = pneg %p170
    // Predicated region
    $region29: #{quantized_conv3d.1} parent=5 // pred_check
      _
    $region30: #{quantized_conv3d.1} parent=5 // pred_check_branch
      %173 = sbr.rel (%p170) target = $region32
    $region31: #{quantized_conv3d.1} parent=5 // pred_region
      %s174 = ssub.s32 %s9, 1
      %s175 = smul.u32 16, %s18
      %p176 = scmp.lt.s32.totalorder %s175, 31
      %s177 = scalar_select %p176, %s175, 31
      %s178 = smul.addr %s177, 8
      %s179 = scalar_lea.vmem %s0, %s178
      %p180 = pneg %p47
      %p181 = pneg %p44
      %p182 = scmp.lt.s32.totalorder %s19, 0
      %s183 = scalar_select %p182, %s19, 0
      %s184 = smul.addr %s183, 4
      %s185 = scalar_lea.vmem %s1, %s184
      %p186 = pneg %p73
      %p187 = pneg %p70
      %p188 = scmp.lt.s32.totalorder %s19, 0
      %s189 = scalar_select %p188, %s19, 0
      %s190 = scalar_lea.vmem %s2, %s189
      %p191 = pneg %p99
      %p192 = pneg %p96
      %p193 = pneg %p127
      %p194 = pneg %p124
      %s195 = smul.u32 64, %s18
      %p196 = scmp.lt.s32.totalorder %s195, 127
      %s197 = scalar_select %p196, %s195, 127
      %p198 = scmp.lt.s32.totalorder %s19, 0
      %s199 = scalar_select %p198, %s19, 0
      %s200 = sadd.s32 %s199, %s197
      %s201 = smul.addr %s200, 2
      %s202 = scalar_lea.vmem %s3, %s201
      %s203 = smul.u32 16, %s18
      %p204 = scmp.lt.s32.totalorder %s203, 31
      %s205 = scalar_select %p204, %s203, 31
      %s206 = smul.addr %s205, 8
      %s207 = scalar_lea.vmem %s0, %s206
      %s208 = smul.u32 16, %s18
      %p209 = scmp.lt.s32.totalorder %s19, 0
      %s210 = scalar_select %p209, %s19, 0
      %s211 = smul.addr %s210, 4
      %s212 = scalar_lea.vmem %s1, %s211
      %p213 = scmp.lt.s32.totalorder %s19, 0
      %s214 = scalar_select %p213, %s19, 0
      %s215 = scalar_lea.vmem %s2, %s214
      %s216 = smul.u32 64, %s18
      %p217 = scmp.lt.s32.totalorder %s216, 127
      %s218 = scalar_select %p217, %s216, 127
      %p219 = scmp.lt.s32.totalorder %s19, 0
      %s220 = scalar_select %p219, %s19, 0
      %s221 = sadd.s32 %s220, %s218
      %s222 = smul.addr %s221, 2
      %s223 = scalar_lea.vmem %s3, %s222
      %s224 = smul.u32 64, %s18
      %v226 = vld [vmem:[%s207] sm:$0xff]
      %v227 = vld [vmem:[%s207 + $0x8] sm:$0xff]
      %v228 = vld [vmem:[%s207 + $0x10] sm:$0xff]
      %v229 = vld [vmem:[%s207 + $0x18] sm:$0xff]
      %v230 = vld [vmem:[%s207 + $0x20] sm:$0xff]
      %v231 = vld [vmem:[%s207 + $0x28] sm:$0xff]
      %v232 = vld [vmem:[%s207 + $0x30] sm:$0xff]
      %v233 = vld [vmem:[%s207 + $0x38] sm:$0xff]
      %v234 = vld [vmem:[%s207 + $0x40] sm:$0xff]
      %v235 = vld [vmem:[%s207 + $0x48] sm:$0xff]
      %v236 = vld [vmem:[%s207 + $0x50] sm:$0xff]
      %v237 = vld [vmem:[%s207 + $0x58] sm:$0xff]
      %v238 = vld [vmem:[%s207 + $0x60] sm:$0xff]
      %v239 = vld [vmem:[%s207 + $0x68] sm:$0xff]
      %v240 = vld [vmem:[%s207 + $0x70] sm:$0xff]
      %v241 = vld [vmem:[%s207 + $0x78] sm:$0xff]
      %v242 = vunpack.c.l.s8.bf16 %v226
      %v243 = vunpack.c.h.s8.bf16 %v226
      %v244 = vunpack.c.l.s8.bf16 %v227
      %v245 = vunpack.c.h.s8.bf16 %v227
      %v246 = vunpack.c.l.s8.bf16 %v228
      %v247 = vunpack.c.h.s8.bf16 %v228
      %v248 = vunpack.c.l.s8.bf16 %v229
      %v249 = vunpack.c.h.s8.bf16 %v229
      %v250 = vunpack.c.l.s8.bf16 %v230
      %v251 = vunpack.c.h.s8.bf16 %v230
      %v252 = vunpack.c.l.s8.bf16 %v231
      %v253 = vunpack.c.h.s8.bf16 %v231
      %v254 = vunpack.c.l.s8.bf16 %v232
      %v255 = vunpack.c.h.s8.bf16 %v232
      %v256 = vunpack.c.l.s8.bf16 %v233
      %v257 = vunpack.c.h.s8.bf16 %v233
      %v258 = vunpack.c.l.s8.bf16 %v234
      %v259 = vunpack.c.h.s8.bf16 %v234
      %v260 = vunpack.c.l.s8.bf16 %v235
      %v261 = vunpack.c.h.s8.bf16 %v235
      %v262 = vunpack.c.l.s8.bf16 %v236
      %v263 = vunpack.c.h.s8.bf16 %v236
      %v264 = vunpack.c.l.s8.bf16 %v237
      %v265 = vunpack.c.h.s8.bf16 %v237
      %v266 = vunpack.c.l.s8.bf16 %v238
      %v267 = vunpack.c.h.s8.bf16 %v238
      %v268 = vunpack.c.l.s8.bf16 %v239
      %v269 = vunpack.c.h.s8.bf16 %v239
      %v270 = vunpack.c.l.s8.bf16 %v240
      %v271 = vunpack.c.h.s8.bf16 %v240
      %v272 = vunpack.c.l.s8.bf16 %v241
      %v273 = vunpack.c.h.s8.bf16 %v241
      %v274 = vld [vmem:[%s212] sm:$0xf]
      %v275 = vld [vmem:[%s212 + $0x4] sm:$0xf]
      %v276 = vld [vmem:[%s212 + $0x8] sm:$0xf]
      %v277 = vld [vmem:[%s212 + $0xc] sm:$0xf]
      %v278 = vld [vmem:[%s212 + $0x10] sm:$0xf]
      %v279 = vld [vmem:[%s212 + $0x14] sm:$0xf]
      %v280 = vld [vmem:[%s212 + $0x18] sm:$0xf]
      %v281 = vld [vmem:[%s212 + $0x1c] sm:$0xf]
      %v282 = vld [vmem:[%s212 + $0x20] sm:$0xf]
      %v283 = vld [vmem:[%s212 + $0x24] sm:$0xf]
      %v284 = vld [vmem:[%s212 + $0x28] sm:$0xf]
      %v285 = vld [vmem:[%s212 + $0x2c] sm:$0xf]
      %v286 = vld [vmem:[%s212 + $0x30] sm:$0xf]
      %v287 = vld [vmem:[%s212 + $0x34] sm:$0xf]
      %v288 = vld [vmem:[%s212 + $0x38] sm:$0xf]
      %v289 = vld [vmem:[%s212 + $0x3c] sm:$0xf]
      %v306 = vunpack.c.l.b16 %v274
      %v307 = vunpack.c.l.b16 %v275
      %v308 = vunpack.c.l.b16 %v276
      %v309 = vunpack.c.l.b16 %v277
      %v310 = vunpack.c.l.b16 %v278
      %v311 = vunpack.c.l.b16 %v279
      %v312 = vunpack.c.l.b16 %v280
      %v313 = vunpack.c.l.b16 %v281
      %v314 = vunpack.c.l.b16 %v282
      %v315 = vunpack.c.l.b16 %v283
      %v316 = vunpack.c.l.b16 %v284
      %v317 = vunpack.c.l.b16 %v285
      %v318 = vunpack.c.l.b16 %v286
      %v319 = vunpack.c.l.b16 %v287
      %v320 = vunpack.c.l.b16 %v288
      %v321 = vunpack.c.l.b16 %v289
      %v322 = vpack.c.b16 %v307, %v306
      %v323 = vpack.c.b16 %v309, %v308
      %v324 = vpack.c.b16 %v311, %v310
      %v325 = vpack.c.b16 %v313, %v312
      %v326 = vpack.c.b16 %v315, %v314
      %v327 = vpack.c.b16 %v317, %v316
      %v328 = vpack.c.b16 %v319, %v318
      %v329 = vpack.c.b16 %v321, %v320
      %338 = vmatprep.subr.bf16.mxu0 0
      %339 = vmatpush1.bf16.msra.mxu0 %v322
      %340 = vmatprep.subr.bf16.mxu0 0
      %341 = vmatpush1.bf16.msra.mxu0 %v323
      %342 = vmatprep.subr.bf16.mxu0 0
      %343 = vmatpush1.bf16.msra.mxu0 %v324
      %344 = vmatprep.subr.bf16.mxu0 0
      %345 = vmatpush1.bf16.msra.mxu0 %v325
      %346 = vmatprep.subr.bf16.mxu0 0
      %347 = vmatpush1.bf16.msra.mxu0 %v326
      %348 = vmatprep.subr.bf16.mxu0 0
      %349 = vmatpush1.bf16.msra.mxu0 %v327
      %350 = vmatprep.subr.bf16.mxu0 0
      %351 = vmatpush1.bf16.msra.mxu0 %v328
      %352 = vmatprep.subr.bf16.mxu0 0
      %353 = vmatpush1.bf16.msra.mxu0 %v329
      %354 = vmatprep.subr.bf16.mxu0 0
      %355 = vmatpush1.bf16.msra.mxu0 0
      %356 = vmatprep.subr.bf16.mxu0 0
      %357 = vmatpush1.bf16.msra.mxu0 0
      %358 = vmatprep.subr.bf16.mxu0 0
      %359 = vmatpush1.bf16.msra.mxu0 0
      %360 = vmatprep.subr.bf16.mxu0 0
      %361 = vmatpush1.bf16.msra.mxu0 0
      %362 = vmatprep.subr.bf16.mxu0 0
      %363 = vmatpush1.bf16.msra.mxu0 0
      %364 = vmatprep.subr.bf16.mxu0 0
      %365 = vmatpush1.bf16.msra.mxu0 0
      %366 = vmatprep.subr.bf16.mxu0 0
      %367 = vmatpush1.bf16.msra.mxu0 0
      %368 = vmatprep.subr.bf16.mxu0 0
      %369 = vmatpush1.bf16.msra.mxu0 0
      %370 = vmatprep.mubr.bf16.mxu0 0
      %371 = vmatmul.mubr.bf16.gmra.mrb[0].mxu0 %v242
      %v372 = vpop.f32.mrb[0].mxu0
      %v373 = vadd.f32 0.0, %v372
      %v374 = vpop.f32.mrb[0].mxu0
      %v375 = vpop.f32.mrb[0].mxu0
      %v376 = vadd.f32 0.0, %v375
      %v377 = vpop.f32.mrb[0].mxu0
      %378 = vmatprep.mubr.bf16.mxu0 0
      %379 = vmatmul.mubr.bf16.gmra.mrb[0].mxu0 %v243
      %v380 = vpop.f32.mrb[0].mxu0
      %v381 = vadd.f32 0.0, %v380
      %v382 = vpop.f32.mrb[0].mxu0
      %v383 = vpop.f32.mrb[0].mxu0
      %v384 = vadd.f32 0.0, %v383
      %v385 = vpop.f32.mrb[0].mxu0
      %386 = vmatprep.mubr.bf16.mxu0 0
      %387 = vmatmul.mubr.bf16.gmra.mrb[0].mxu0 %v244
      %v388 = vpop.f32.mrb[0].mxu0
      %v389 = vadd.f32 0.0, %v388
      %v390 = vpop.f32.mrb[0].mxu0
      %v391 = vpop.f32.mrb[0].mxu0
      %v392 = vadd.f32 0.0, %v391
      %v393 = vpop.f32.mrb[0].mxu0
      %394 = vmatprep.mubr.bf16.mxu0 0
      %395 = vmatmul.mubr.bf16.gmra.mrb[0].mxu0 %v245
      %v396 = vpop.f32.mrb[0].mxu0
      %v397 = vadd.f32 0.0, %v396
      %v398 = vpop.f32.mrb[0].mxu0
      %v399 = vpop.f32.mrb[0].mxu0
      %v400 = vadd.f32 0.0, %v399
      %v401 = vpop.f32.mrb[0].mxu0
      %402 = vmatprep.mubr.bf16.mxu0 0
      %403 = vmatmul.mubr.bf16.gmra.mrb[0].mxu0 %v246
      %v404 = vpop.f32.mrb[0].mxu0
      %v405 = vadd.f32 0.0, %v404
      %v406 = vpop.f32.mrb[0].mxu0
      %v407 = vpop.f32.mrb[0].mxu0
      %v408 = vadd.f32 0.0, %v407
      %v409 = vpop.f32.mrb[0].mxu0
      %410 = vmatprep.mubr.bf16.mxu0 0
      %411 = vmatmul.mubr.bf16.gmra.mrb[0].mxu0 %v247
      %v412 = vpop.f32.mrb[0].mxu0
      %v413 = vadd.f32 0.0, %v412
      %v414 = vpop.f32.mrb[0].mxu0
      %v415 = vpop.f32.mrb[0].mxu0
      %v416 = vadd.f32 0.0, %v415
      %v417 = vpop.f32.mrb[0].mxu0
      %418 = vmatprep.mubr.bf16.mxu0 0
      %419 = vmatmul.mubr.bf16.gmra.mrb[0].mxu0 %v248
      %v420 = vpop.f32.mrb[0].mxu0
      %v421 = vadd.f32 0.0, %v420
      %v422 = vpop.f32.mrb[0].mxu0
      %v423 = vpop.f32.mrb[0].mxu0
      %v424 = vadd.f32 0.0, %v423
      %v425 = vpop.f32.mrb[0].mxu0
      %426 = vmatprep.mubr.bf16.mxu0 0
      %427 = vmatmul.mubr.bf16.gmra.mrb[0].mxu0 %v249
      %v428 = vpop.f32.mrb[0].mxu0
      %v429 = vadd.f32 0.0, %v428
      %v430 = vpop.f32.mrb[0].mxu0
      %v431 = vpop.f32.mrb[0].mxu0
      %v432 = vadd.f32 0.0, %v431
      %v433 = vpop.f32.mrb[0].mxu0
      %434 = vmatprep.mubr.bf16.mxu0 0
      %435 = vmatmul.mubr.bf16.gmra.mrb[0].mxu0 %v250
      %v436 = vpop.f32.mrb[0].mxu0
      %v437 = vadd.f32 0.0, %v436
      %v438 = vpop.f32.mrb[0].mxu0
      %v439 = vpop.f32.mrb[0].mxu0
      %v440 = vadd.f32 0.0, %v439
      %v441 = vpop.f32.mrb[0].mxu0
      %442 = vmatprep.mubr.bf16.mxu0 0
      %443 = vmatmul.mubr.bf16.gmra.mrb[0].mxu0 %v251
      %v444 = vpop.f32.mrb[0].mxu0
      %v445 = vadd.f32 0.0, %v444
      %v446 = vpop.f32.mrb[0].mxu0
      %v447 = vpop.f32.mrb[0].mxu0
      %v448 = vadd.f32 0.0, %v447
      %v449 = vpop.f32.mrb[0].mxu0
      %450 = vmatprep.mubr.bf16.mxu0 0
      %451 = vmatmul.mubr.bf16.gmra.mrb[0].mxu0 %v252
      %v452 = vpop.f32.mrb[0].mxu0
      %v453 = vadd.f32 0.0, %v452
      %v454 = vpop.f32.mrb[0].mxu0
      %v455 = vpop.f32.mrb[0].mxu0
      %v456 = vadd.f32 0.0, %v455
      %v457 = vpop.f32.mrb[0].mxu0
      %458 = vmatprep.mubr.bf16.mxu0 0
      %459 = vmatmul.mubr.bf16.gmra.mrb[0].mxu0 %v253
      %v460 = vpop.f32.mrb[0].mxu0
      %v461 = vadd.f32 0.0, %v460
      %v462 = vpop.f32.mrb[0].mxu0
      %v463 = vpop.f32.mrb[0].mxu0
      %v464 = vadd.f32 0.0, %v463
      %v465 = vpop.f32.mrb[0].mxu0
      %466 = vmatprep.mubr.bf16.mxu0 0
      %467 = vmatmul.mubr.bf16.gmra.mrb[0].mxu0 %v254
      %v468 = vpop.f32.mrb[0].mxu0
      %v469 = vadd.f32 0.0, %v468
      %v470 = vpop.f32.mrb[0].mxu0
      %v471 = vpop.f32.mrb[0].mxu0
      %v472 = vadd.f32 0.0, %v471
      %v473 = vpop.f32.mrb[0].mxu0
      %474 = vmatprep.mubr.bf16.mxu0 0
      %475 = vmatmul.mubr.bf16.gmra.mrb[0].mxu0 %v255
      %v476 = vpop.f32.mrb[0].mxu0
      %v477 = vadd.f32 0.0, %v476
      %v478 = vpop.f32.mrb[0].mxu0
      %v479 = vpop.f32.mrb[0].mxu0
      %v480 = vadd.f32 0.0, %v479
      %v481 = vpop.f32.mrb[0].mxu0
      %482 = vmatprep.mubr.bf16.mxu0 0
      %483 = vmatmul.mubr.bf16.gmra.mrb[0].mxu0 %v256
      %v484 = vpop.f32.mrb[0].mxu0
      %v485 = vadd.f32 0.0, %v484
      %v486 = vpop.f32.mrb[0].mxu0
      %v487 = vpop.f32.mrb[0].mxu0
      %v488 = vadd.f32 0.0, %v487
      %v489 = vpop.f32.mrb[0].mxu0
      %490 = vmatprep.mubr.bf16.mxu0 0
      %491 = vmatmul.mubr.bf16.gmra.mrb[0].mxu0 %v257
      %v492 = vpop.f32.mrb[0].mxu0
      %v493 = vadd.f32 0.0, %v492
      %v494 = vpop.f32.mrb[0].mxu0
      %v495 = vpop.f32.mrb[0].mxu0
      %v496 = vadd.f32 0.0, %v495
      %v497 = vpop.f32.mrb[0].mxu0
      %498 = vmatprep.mubr.bf16.mxu0 0
      %499 = vmatmul.mubr.bf16.gmra.mrb[0].mxu0 %v258
      %v500 = vpop.f32.mrb[0].mxu0
      %v501 = vadd.f32 0.0, %v500
      %v502 = vpop.f32.mrb[0].mxu0
      %v503 = vpop.f32.mrb[0].mxu0
      %v504 = vadd.f32 0.0, %v503
      %v505 = vpop.f32.mrb[0].mxu0
      %506 = vmatprep.mubr.bf16.mxu0 0
      %507 = vmatmul.mubr.bf16.gmra.mrb[0].mxu0 %v259
      %v508 = vpop.f32.mrb[0].mxu0
      %v509 = vadd.f32 0.0, %v508
      %v510 = vpop.f32.mrb[0].mxu0
      %v511 = vpop.f32.mrb[0].mxu0
      %v512 = vadd.f32 0.0, %v511
      %v513 = vpop.f32.mrb[0].mxu0
      %514 = vmatprep.mubr.bf16.mxu0 0
      %515 = vmatmul.mubr.bf16.gmra.mrb[0].mxu0 %v260
      %v516 = vpop.f32.mrb[0].mxu0
      %v517 = vadd.f32 0.0, %v516
      %v518 = vpop.f32.mrb[0].mxu0
      %v519 = vpop.f32.mrb[0].mxu0
      %v520 = vadd.f32 0.0, %v519
      %v521 = vpop.f32.mrb[0].mxu0
      %522 = vmatprep.mubr.bf16.mxu0 0
      %523 = vmatmul.mubr.bf16.gmra.mrb[0].mxu0 %v261
      %v524 = vpop.f32.mrb[0].mxu0
      %v525 = vadd.f32 0.0, %v524
      %v526 = vpop.f32.mrb[0].mxu0
      %v527 = vpop.f32.mrb[0].mxu0
      %v528 = vadd.f32 0.0, %v527
      %v529 = vpop.f32.mrb[0].mxu0
      %530 = vmatprep.mubr.bf16.mxu0 0
      %531 = vmatmul.mubr.bf16.gmra.mrb[0].mxu0 %v262
      %v532 = vpop.f32.mrb[0].mxu0
      %v533 = vadd.f32 0.0, %v532
      %v534 = vpop.f32.mrb[0].mxu0
      %v535 = vpop.f32.mrb[0].mxu0
      %v536 = vadd.f32 0.0, %v535
      %v537 = vpop.f32.mrb[0].mxu0
      %538 = vmatprep.mubr.bf16.mxu0 0
      %539 = vmatmul.mubr.bf16.gmra.mrb[0].mxu0 %v263
      %v540 = vpop.f32.mrb[0].mxu0
      %v541 = vadd.f32 0.0, %v540
      %v542 = vpop.f32.mrb[0].mxu0
      %v543 = vpop.f32.mrb[0].mxu0
      %v544 = vadd.f32 0.0, %v543
      %v545 = vpop.f32.mrb[0].mxu0
      %546 = vmatprep.mubr.bf16.mxu0 0
      %547 = vmatmul.mubr.bf16.gmra.mrb[0].mxu0 %v264
      %v548 = vpop.f32.mrb[0].mxu0
      %v549 = vadd.f32 0.0, %v548
      %v550 = vpop.f32.mrb[0].mxu0
      %v551 = vpop.f32.mrb[0].mxu0
      %v552 = vadd.f32 0.0, %v551
      %v553 = vpop.f32.mrb[0].mxu0
      %554 = vmatprep.mubr.bf16.mxu0 0
      %555 = vmatmul.mubr.bf16.gmra.mrb[0].mxu0 %v265
      %v556 = vpop.f32.mrb[0].mxu0
      %v557 = vadd.f32 0.0, %v556
      %v558 = vpop.f32.mrb[0].mxu0
      %v559 = vpop.f32.mrb[0].mxu0
      %v560 = vadd.f32 0.0, %v559
      %v561 = vpop.f32.mrb[0].mxu0
      %562 = vmatprep.mubr.bf16.mxu0 0
      %563 = vmatmul.mubr.bf16.gmra.mrb[0].mxu0 %v266
      %v564 = vpop.f32.mrb[0].mxu0
      %v565 = vadd.f32 0.0, %v564
      %v566 = vpop.f32.mrb[0].mxu0
      %v567 = vpop.f32.mrb[0].mxu0
      %v568 = vadd.f32 0.0, %v567
      %v569 = vpop.f32.mrb[0].mxu0
      %570 = vmatprep.mubr.bf16.mxu0 0
      %571 = vmatmul.mubr.bf16.gmra.mrb[0].mxu0 %v267
      %v572 = vpop.f32.mrb[0].mxu0
      %v573 = vadd.f32 0.0, %v572
      %v574 = vpop.f32.mrb[0].mxu0
      %v575 = vpop.f32.mrb[0].mxu0
      %v576 = vadd.f32 0.0, %v575
      %v577 = vpop.f32.mrb[0].mxu0
      %578 = vmatprep.mubr.bf16.mxu0 0
      %579 = vmatmul.mubr.bf16.gmra.mrb[0].mxu0 %v268
      %v580 = vpop.f32.mrb[0].mxu0
      %v581 = vadd.f32 0.0, %v580
      %v582 = vpop.f32.mrb[0].mxu0
      %v583 = vpop.f32.mrb[0].mxu0
      %v584 = vadd.f32 0.0, %v583
      %v585 = vpop.f32.mrb[0].mxu0
      %586 = vmatprep.mubr.bf16.mxu0 0
      %587 = vmatmul.mubr.bf16.gmra.mrb[0].mxu0 %v269
      %v588 = vpop.f32.mrb[0].mxu0
      %v589 = vadd.f32 0.0, %v588
      %v590 = vpop.f32.mrb[0].mxu0
      %v591 = vpop.f32.mrb[0].mxu0
      %v592 = vadd.f32 0.0, %v591
      %v593 = vpop.f32.mrb[0].mxu0
      %594 = vmatprep.mubr.bf16.mxu0 0
      %595 = vmatmul.mubr.bf16.gmra.mrb[0].mxu0 %v270
      %v596 = vpop.f32.mrb[0].mxu0
      %v597 = vadd.f32 0.0, %v596
      %v598 = vpop.f32.mrb[0].mxu0
      %v599 = vpop.f32.mrb[0].mxu0
      %v600 = vadd.f32 0.0, %v599
      %v601 = vpop.f32.mrb[0].mxu0
      %602 = vmatprep.mubr.bf16.mxu0 0
      %603 = vmatmul.mubr.bf16.gmra.mrb[0].mxu0 %v271
      %v604 = vpop.f32.mrb[0].mxu0
      %v605 = vadd.f32 0.0, %v604
      %v606 = vpop.f32.mrb[0].mxu0
      %v607 = vpop.f32.mrb[0].mxu0
      %v608 = vadd.f32 0.0, %v607
      %v609 = vpop.f32.mrb[0].mxu0
      %610 = vmatprep.mubr.bf16.mxu0 0
      %611 = vmatmul.mubr.bf16.gmra.mrb[0].mxu0 %v272
      %v612 = vpop.f32.mrb[0].mxu0
      %v613 = vadd.f32 0.0, %v612
      %v614 = vpop.f32.mrb[0].mxu0
      %v615 = vpop.f32.mrb[0].mxu0
      %v616 = vadd.f32 0.0, %v615
      %v617 = vpop.f32.mrb[0].mxu0
      %618 = vmatprep.mubr.bf16.mxu0 0
      %619 = vmatmul.mubr.bf16.gmra.mrb[0].mxu0 %v273
      %v620 = vpop.f32.mrb[0].mxu0
      %v621 = vadd.f32 0.0, %v620
      %v622 = vpop.f32.mrb[0].mxu0
      %v623 = vpop.f32.mrb[0].mxu0
      %v624 = vadd.f32 0.0, %v623
      %v625 = vpop.f32.mrb[0].mxu0
      %626 = vdwg.mxu0
      %v627 = vmul.f32 %v373, 0.01
      %v628 = vmul.f32 %v376, 0.01
      %v629 = vmul.f32 %v381, 0.01
      %v630 = vmul.f32 %v384, 0.01
      %v631 = vmul.f32 %v389, 0.01
      %v632 = vmul.f32 %v392, 0.01
      %v633 = vmul.f32 %v397, 0.01
      %v634 = vmul.f32 %v400, 0.01
      %v635 = vmul.f32 %v405, 0.01
      %v636 = vmul.f32 %v408, 0.01
      %v637 = vmul.f32 %v413, 0.01
      %v638 = vmul.f32 %v416, 0.01
      %v639 = vmul.f32 %v421, 0.01
      %v640 = vmul.f32 %v424, 0.01
      %v641 = vmul.f32 %v429, 0.01
      %v642 = vmul.f32 %v432, 0.01
      %v643 = vmul.f32 %v437, 0.01
      %v644 = vmul.f32 %v440, 0.01
      %v645 = vmul.f32 %v445, 0.01
      %v646 = vmul.f32 %v448, 0.01
      %v647 = vmul.f32 %v453, 0.01
      %v648 = vmul.f32 %v456, 0.01
      %v649 = vmul.f32 %v461, 0.01
      %v650 = vmul.f32 %v464, 0.01
      %v651 = vmul.f32 %v469, 0.01
      %v652 = vmul.f32 %v472, 0.01
      %v653 = vmul.f32 %v477, 0.01
      %v654 = vmul.f32 %v480, 0.01
      %v655 = vmul.f32 %v485, 0.01
      %v656 = vmul.f32 %v488, 0.01
      %v657 = vmul.f32 %v493, 0.01
      %v658 = vmul.f32 %v496, 0.01
      %v659 = vmul.f32 %v501, 0.01
      %v660 = vmul.f32 %v504, 0.01
      %v661 = vmul.f32 %v509, 0.01
      %v662 = vmul.f32 %v512, 0.01
      %v663 = vmul.f32 %v517, 0.01
      %v664 = vmul.f32 %v520, 0.01
      %v665 = vmul.f32 %v525, 0.01
      %v666 = vmul.f32 %v528, 0.01
      %v667 = vmul.f32 %v533, 0.01
      %v668 = vmul.f32 %v536, 0.01
      %v669 = vmul.f32 %v541, 0.01
      %v670 = vmul.f32 %v544, 0.01
      %v671 = vmul.f32 %v549, 0.01
      %v672 = vmul.f32 %v552, 0.01
      %v673 = vmul.f32 %v557, 0.01
      %v674 = vmul.f32 %v560, 0.01
      %v675 = vmul.f32 %v565, 0.01
      %v676 = vmul.f32 %v568, 0.01
      %v677 = vmul.f32 %v573, 0.01
      %v678 = vmul.f32 %v576, 0.01
      %v679 = vmul.f32 %v581, 0.01
      %v680 = vmul.f32 %v584, 0.01
      %v681 = vmul.f32 %v589, 0.01
      %v682 = vmul.f32 %v592, 0.01
      %v683 = vmul.f32 %v597, 0.01
      %v684 = vmul.f32 %v600, 0.01
      %v685 = vmul.f32 %v605, 0.01
      %v686 = vmul.f32 %v608, 0.01
      %v687 = vmul.f32 %v613, 0.01
      %v688 = vmul.f32 %v616, 0.01
      %v689 = vmul.f32 %v621, 0.01
      %v690 = vmul.f32 %v624, 0.01
      %v691 = vld [vmem:[%s215] sm:$0x1]
      %v693 = vlaneseq
      %v694 = vshrl.u32 %v693, 7
      %v695 = vsub.s32 0, %v694
      %v696 = vrot.slane %v691, %v695
      %v698 = vadd.f32 %v627, %v696
      %v699 = vadd.f32 %v628, %v696
      %v700 = vadd.f32 %v629, %v696
      %v701 = vadd.f32 %v630, %v696
      %v702 = vadd.f32 %v631, %v696
      %v703 = vadd.f32 %v632, %v696
      %v704 = vadd.f32 %v633, %v696
      %v705 = vadd.f32 %v634, %v696
      %v706 = vadd.f32 %v635, %v696
      %v707 = vadd.f32 %v636, %v696
      %v708 = vadd.f32 %v637, %v696
      %v709 = vadd.f32 %v638, %v696
      %v710 = vadd.f32 %v639, %v696
      %v711 = vadd.f32 %v640, %v696
      %v712 = vadd.f32 %v641, %v696
      %v713 = vadd.f32 %v642, %v696
      %v714 = vadd.f32 %v643, %v696
      %v715 = vadd.f32 %v644, %v696
      %v716 = vadd.f32 %v645, %v696
      %v717 = vadd.f32 %v646, %v696
      %v718 = vadd.f32 %v647, %v696
      %v719 = vadd.f32 %v648, %v696
      %v720 = vadd.f32 %v649, %v696
      %v721 = vadd.f32 %v650, %v696
      %v722 = vadd.f32 %v651, %v696
      %v723 = vadd.f32 %v652, %v696
      %v724 = vadd.f32 %v653, %v696
      %v725 = vadd.f32 %v654, %v696
      %v726 = vadd.f32 %v655, %v696
      %v727 = vadd.f32 %v656, %v696
      %v728 = vadd.f32 %v657, %v696
      %v729 = vadd.f32 %v658, %v696
      %v730 = vadd.f32 %v659, %v696
      %v731 = vadd.f32 %v660, %v696
      %v732 = vadd.f32 %v661, %v696
      %v733 = vadd.f32 %v662, %v696
      %v734 = vadd.f32 %v663, %v696
      %v735 = vadd.f32 %v664, %v696
      %v736 = vadd.f32 %v665, %v696
      %v737 = vadd.f32 %v666, %v696
      %v738 = vadd.f32 %v667, %v696
      %v739 = vadd.f32 %v668, %v696
      %v740 = vadd.f32 %v669, %v696
      %v741 = vadd.f32 %v670, %v696
      %v742 = vadd.f32 %v671, %v696
      %v743 = vadd.f32 %v672, %v696
      %v744 = vadd.f32 %v673, %v696
      %v745 = vadd.f32 %v674, %v696
      %v746 = vadd.f32 %v675, %v696
      %v747 = vadd.f32 %v676, %v696
      %v748 = vadd.f32 %v677, %v696
      %v749 = vadd.f32 %v678, %v696
      %v750 = vadd.f32 %v679, %v696
      %v751 = vadd.f32 %v680, %v696
      %v752 = vadd.f32 %v681, %v696
      %v753 = vadd.f32 %v682, %v696
      %v754 = vadd.f32 %v683, %v696
      %v755 = vadd.f32 %v684, %v696
      %v756 = vadd.f32 %v685, %v696
      %v757 = vadd.f32 %v686, %v696
      %v758 = vadd.f32 %v687, %v696
      %v759 = vadd.f32 %v688, %v696
      %v760 = vadd.f32 %v689, %v696
      %v761 = vadd.f32 %v690, %v696
      %v762 = vround.ne.pseudo %v698
      %v763 = vround.ne.pseudo %v699
      %v764 = vround.ne.pseudo %v700
      %v765 = vround.ne.pseudo %v701
      %v766 = vround.ne.pseudo %v702
      %v767 = vround.ne.pseudo %v703
      %v768 = vround.ne.pseudo %v704
      %v769 = vround.ne.pseudo %v705
      %v770 = vround.ne.pseudo %v706
      %v771 = vround.ne.pseudo %v707
      %v772 = vround.ne.pseudo %v708
      %v773 = vround.ne.pseudo %v709
      %v774 = vround.ne.pseudo %v710
      %v775 = vround.ne.pseudo %v711
      %v776 = vround.ne.pseudo %v712
      %v777 = vround.ne.pseudo %v713
      %v778 = vround.ne.pseudo %v714
      %v779 = vround.ne.pseudo %v715
      %v780 = vround.ne.pseudo %v716
      %v781 = vround.ne.pseudo %v717
      %v782 = vround.ne.pseudo %v718
      %v783 = vround.ne.pseudo %v719
      %v784 = vround.ne.pseudo %v720
      %v785 = vround.ne.pseudo %v721
      %v786 = vround.ne.pseudo %v722
      %v787 = vround.ne.pseudo %v723
      %v788 = vround.ne.pseudo %v724
      %v789 = vround.ne.pseudo %v725
      %v790 = vround.ne.pseudo %v726
      %v791 = vround.ne.pseudo %v727
      %v792 = vround.ne.pseudo %v728
      %v793 = vround.ne.pseudo %v729
      %v794 = vround.ne.pseudo %v730
      %v795 = vround.ne.pseudo %v731
      %v796 = vround.ne.pseudo %v732
      %v797 = vround.ne.pseudo %v733
      %v798 = vround.ne.pseudo %v734
      %v799 = vround.ne.pseudo %v735
      %v800 = vround.ne.pseudo %v736
      %v801 = vround.ne.pseudo %v737
      %v802 = vround.ne.pseudo %v738
      %v803 = vround.ne.pseudo %v739
      %v804 = vround.ne.pseudo %v740
      %v805 = vround.ne.pseudo %v741
      %v806 = vround.ne.pseudo %v742
      %v807 = vround.ne.pseudo %v743
      %v808 = vround.ne.pseudo %v744
      %v809 = vround.ne.pseudo %v745
      %v810 = vround.ne.pseudo %v746
      %v811 = vround.ne.pseudo %v747
      %v812 = vround.ne.pseudo %v748
      %v813 = vround.ne.pseudo %v749
      %v814 = vround.ne.pseudo %v750
      %v815 = vround.ne.pseudo %v751
      %v816 = vround.ne.pseudo %v752
      %v817 = vround.ne.pseudo %v753
      %v818 = vround.ne.pseudo %v754
      %v819 = vround.ne.pseudo %v755
      %v820 = vround.ne.pseudo %v756
      %v821 = vround.ne.pseudo %v757
      %v822 = vround.ne.pseudo %v758
      %v823 = vround.ne.pseudo %v759
      %v824 = vround.ne.pseudo %v760
      %v825 = vround.ne.pseudo %v761
      %v826 = vmax.f32 %v762, 0.0
      %v827 = vmax.f32 %v763, 0.0
      %v828 = vmax.f32 %v764, 0.0
      %v829 = vmax.f32 %v765, 0.0
      %v830 = vmax.f32 %v766, 0.0
      %v831 = vmax.f32 %v767, 0.0
      %v832 = vmax.f32 %v768, 0.0
      %v833 = vmax.f32 %v769, 0.0
      %v834 = vmax.f32 %v770, 0.0
      %v835 = vmax.f32 %v771, 0.0
      %v836 = vmax.f32 %v772, 0.0
      %v837 = vmax.f32 %v773, 0.0
      %v838 = vmax.f32 %v774, 0.0
      %v839 = vmax.f32 %v775, 0.0
      %v840 = vmax.f32 %v776, 0.0
      %v841 = vmax.f32 %v777, 0.0
      %v842 = vmax.f32 %v778, 0.0
      %v843 = vmax.f32 %v779, 0.0
      %v844 = vmax.f32 %v780, 0.0
      %v845 = vmax.f32 %v781, 0.0
      %v846 = vmax.f32 %v782, 0.0
      %v847 = vmax.f32 %v783, 0.0
      %v848 = vmax.f32 %v784, 0.0
      %v849 = vmax.f32 %v785, 0.0
      %v850 = vmax.f32 %v786, 0.0
      %v851 = vmax.f32 %v787, 0.0
      %v852 = vmax.f32 %v788, 0.0
      %v853 = vmax.f32 %v789, 0.0
      %v854 = vmax.f32 %v790, 0.0
      %v855 = vmax.f32 %v791, 0.0
      %v856 = vmax.f32 %v792, 0.0
      %v857 = vmax.f32 %v793, 0.0
      %v858 = vmax.f32 %v794, 0.0
      %v859 = vmax.f32 %v795, 0.0
      %v860 = vmax.f32 %v796, 0.0
      %v861 = vmax.f32 %v797, 0.0
      %v862 = vmax.f32 %v798, 0.0
      %v863 = vmax.f32 %v799, 0.0
      %v864 = vmax.f32 %v800, 0.0
      %v865 = vmax.f32 %v801, 0.0
      %v866 = vmax.f32 %v802, 0.0
      %v867 = vmax.f32 %v803, 0.0
      %v868 = vmax.f32 %v804, 0.0
      %v869 = vmax.f32 %v805, 0.0
      %v870 = vmax.f32 %v806, 0.0
      %v871 = vmax.f32 %v807, 0.0
      %v872 = vmax.f32 %v808, 0.0
      %v873 = vmax.f32 %v809, 0.0
      %v874 = vmax.f32 %v810, 0.0
      %v875 = vmax.f32 %v811, 0.0
      %v876 = vmax.f32 %v812, 0.0
      %v877 = vmax.f32 %v813, 0.0
      %v878 = vmax.f32 %v814, 0.0
      %v879 = vmax.f32 %v815, 0.0
      %v880 = vmax.f32 %v816, 0.0
      %v881 = vmax.f32 %v817, 0.0
      %v882 = vmax.f32 %v818, 0.0
      %v883 = vmax.f32 %v819, 0.0
      %v884 = vmax.f32 %v820, 0.0
      %v885 = vmax.f32 %v821, 0.0
      %v886 = vmax.f32 %v822, 0.0
      %v887 = vmax.f32 %v823, 0.0
      %v888 = vmax.f32 %v824, 0.0
      %v889 = vmax.f32 %v825, 0.0
      %v890 = vmin.f32 %v826, 255.0
      %v891 = vmin.f32 %v827, 255.0
      %v892 = vmin.f32 %v828, 255.0
      %v893 = vmin.f32 %v829, 255.0
      %v894 = vmin.f32 %v830, 255.0
      %v895 = vmin.f32 %v831, 255.0
      %v896 = vmin.f32 %v832, 255.0
      %v897 = vmin.f32 %v833, 255.0
      %v898 = vmin.f32 %v834, 255.0
      %v899 = vmin.f32 %v835, 255.0
      %v900 = vmin.f32 %v836, 255.0
      %v901 = vmin.f32 %v837, 255.0
      %v902 = vmin.f32 %v838, 255.0
      %v903 = vmin.f32 %v839, 255.0
      %v904 = vmin.f32 %v840, 255.0
      %v905 = vmin.f32 %v841, 255.0
      %v906 = vmin.f32 %v842, 255.0
      %v907 = vmin.f32 %v843, 255.0
      %v908 = vmin.f32 %v844, 255.0
      %v909 = vmin.f32 %v845, 255.0
      %v910 = vmin.f32 %v846, 255.0
      %v911 = vmin.f32 %v847, 255.0
      %v912 = vmin.f32 %v848, 255.0
      %v913 = vmin.f32 %v849, 255.0
      %v914 = vmin.f32 %v850, 255.0
      %v915 = vmin.f32 %v851, 255.0
      %v916 = vmin.f32 %v852, 255.0
      %v917 = vmin.f32 %v853, 255.0
      %v918 = vmin.f32 %v854, 255.0
      %v919 = vmin.f32 %v855, 255.0
      %v920 = vmin.f32 %v856, 255.0
      %v921 = vmin.f32 %v857, 255.0
      %v922 = vmin.f32 %v858, 255.0
      %v923 = vmin.f32 %v859, 255.0
      %v924 = vmin.f32 %v860, 255.0
      %v925 = vmin.f32 %v861, 255.0
      %v926 = vmin.f32 %v862, 255.0
      %v927 = vmin.f32 %v863, 255.0
      %v928 = vmin.f32 %v864, 255.0
      %v929 = vmin.f32 %v865, 255.0
      %v930 = vmin.f32 %v866, 255.0
      %v931 = vmin.f32 %v867, 255.0
      %v932 = vmin.f32 %v868, 255.0
      %v933 = vmin.f32 %v869, 255.0
      %v934 = vmin.f32 %v870, 255.0
      %v935 = vmin.f32 %v871, 255.0
      %v936 = vmin.f32 %v872, 255.0
      %v937 = vmin.f32 %v873, 255.0
      %v938 = vmin.f32 %v874, 255.0
      %v939 = vmin.f32 %v875, 255.0
      %v940 = vmin.f32 %v876, 255.0
      %v941 = vmin.f32 %v877, 255.0
      %v942 = vmin.f32 %v878, 255.0
      %v943 = vmin.f32 %v879, 255.0
      %v944 = vmin.f32 %v880, 255.0
      %v945 = vmin.f32 %v881, 255.0
      %v946 = vmin.f32 %v882, 255.0
      %v947 = vmin.f32 %v883, 255.0
      %v948 = vmin.f32 %v884, 255.0
      %v949 = vmin.f32 %v885, 255.0
      %v950 = vmin.f32 %v886, 255.0
      %v951 = vmin.f32 %v887, 255.0
      %v952 = vmin.f32 %v888, 255.0
      %v953 = vmin.f32 %v889, 255.0
      %v954 = vcvt.f32.s32.to.zero.pseudo %v890
      %v955 = vcvt.f32.s32.to.zero.pseudo %v891
      %v956 = vcvt.f32.s32.to.zero.pseudo %v892
      %v957 = vcvt.f32.s32.to.zero.pseudo %v893
      %v958 = vcvt.f32.s32.to.zero.pseudo %v894
      %v959 = vcvt.f32.s32.to.zero.pseudo %v895
      %v960 = vcvt.f32.s32.to.zero.pseudo %v896
      %v961 = vcvt.f32.s32.to.zero.pseudo %v897
      %v962 = vcvt.f32.s32.to.zero.pseudo %v898
      %v963 = vcvt.f32.s32.to.zero.pseudo %v899
      %v964 = vcvt.f32.s32.to.zero.pseudo %v900
      %v965 = vcvt.f32.s32.to.zero.pseudo %v901
      %v966 = vcvt.f32.s32.to.zero.pseudo %v902
      %v967 = vcvt.f32.s32.to.zero.pseudo %v903
      %v968 = vcvt.f32.s32.to.zero.pseudo %v904
      %v969 = vcvt.f32.s32.to.zero.pseudo %v905
      %v970 = vcvt.f32.s32.to.zero.pseudo %v906
      %v971 = vcvt.f32.s32.to.zero.pseudo %v907
      %v972 = vcvt.f32.s32.to.zero.pseudo %v908
      %v973 = vcvt.f32.s32.to.zero.pseudo %v909
      %v974 = vcvt.f32.s32.to.zero.pseudo %v910
      %v975 = vcvt.f32.s32.to.zero.pseudo %v911
      %v976 = vcvt.f32.s32.to.zero.pseudo %v912
      %v977 = vcvt.f32.s32.to.zero.pseudo %v913
      %v978 = vcvt.f32.s32.to.zero.pseudo %v914
      %v979 = vcvt.f32.s32.to.zero.pseudo %v915
      %v980 = vcvt.f32.s32.to.zero.pseudo %v916
      %v981 = vcvt.f32.s32.to.zero.pseudo %v917
      %v982 = vcvt.f32.s32.to.zero.pseudo %v918
      %v983 = vcvt.f32.s32.to.zero.pseudo %v919
      %v984 = vcvt.f32.s32.to.zero.pseudo %v920
      %v985 = vcvt.f32.s32.to.zero.pseudo %v921
      %v986 = vcvt.f32.s32.to.zero.pseudo %v922
      %v987 = vcvt.f32.s32.to.zero.pseudo %v923
      %v988 = vcvt.f32.s32.to.zero.pseudo %v924
      %v989 = vcvt.f32.s32.to.zero.pseudo %v925
      %v990 = vcvt.f32.s32.to.zero.pseudo %v926
      %v991 = vcvt.f32.s32.to.zero.pseudo %v927
      %v992 = vcvt.f32.s32.to.zero.pseudo %v928
      %v993 = vcvt.f32.s32.to.zero.pseudo %v929
      %v994 = vcvt.f32.s32.to.zero.pseudo %v930
      %v995 = vcvt.f32.s32.to.zero.pseudo %v931
      %v996 = vcvt.f32.s32.to.zero.pseudo %v932
      %v997 = vcvt.f32.s32.to.zero.pseudo %v933
      %v998 = vcvt.f32.s32.to.zero.pseudo %v934
      %v999 = vcvt.f32.s32.to.zero.pseudo %v935
      %v1000 = vcvt.f32.s32.to.zero.pseudo %v936
      %v1001 = vcvt.f32.s32.to.zero.pseudo %v937
      %v1002 = vcvt.f32.s32.to.zero.pseudo %v938
      %v1003 = vcvt.f32.s32.to.zero.pseudo %v939
      %v1004 = vcvt.f32.s32.to.zero.pseudo %v940
      %v1005 = vcvt.f32.s32.to.zero.pseudo %v941
      %v1006 = vcvt.f32.s32.to.zero.pseudo %v942
      %v1007 = vcvt.f32.s32.to.zero.pseudo %v943
      %v1008 = vcvt.f32.s32.to.zero.pseudo %v944
      %v1009 = vcvt.f32.s32.to.zero.pseudo %v945
      %v1010 = vcvt.f32.s32.to.zero.pseudo %v946
      %v1011 = vcvt.f32.s32.to.zero.pseudo %v947
      %v1012 = vcvt.f32.s32.to.zero.pseudo %v948
      %v1013 = vcvt.f32.s32.to.zero.pseudo %v949
      %v1014 = vcvt.f32.s32.to.zero.pseudo %v950
      %v1015 = vcvt.f32.s32.to.zero.pseudo %v951
      %v1016 = vcvt.f32.s32.to.zero.pseudo %v952
      %v1017 = vcvt.f32.s32.to.zero.pseudo %v953
      %v1018 = vpack.c.b16 %v954, %v954
      %v1019 = vpack.c.b8 %v1018, %v1018
      %v1020 = vpack.c.b16 %v955, %v955
      %v1021 = vpack.c.b8 %v1020, %v1020
      %v1022 = vpack.c.b16 %v956, %v956
      %v1023 = vpack.c.b8 %v1022, %v1022
      %v1024 = vpack.c.b16 %v957, %v957
      %v1025 = vpack.c.b8 %v1024, %v1024
      %v1026 = vpack.c.b16 %v958, %v958
      %v1027 = vpack.c.b8 %v1026, %v1026
      %v1028 = vpack.c.b16 %v959, %v959
      %v1029 = vpack.c.b8 %v1028, %v1028
      %v1030 = vpack.c.b16 %v960, %v960
      %v1031 = vpack.c.b8 %v1030, %v1030
      %v1032 = vpack.c.b16 %v961, %v961
      %v1033 = vpack.c.b8 %v1032, %v1032
      %v1034 = vpack.c.b16 %v962, %v962
      %v1035 = vpack.c.b8 %v1034, %v1034
      %v1036 = vpack.c.b16 %v963, %v963
      %v1037 = vpack.c.b8 %v1036, %v1036
      %v1038 = vpack.c.b16 %v964, %v964
      %v1039 = vpack.c.b8 %v1038, %v1038
      %v1040 = vpack.c.b16 %v965, %v965
      %v1041 = vpack.c.b8 %v1040, %v1040
      %v1042 = vpack.c.b16 %v966, %v966
      %v1043 = vpack.c.b8 %v1042, %v1042
      %v1044 = vpack.c.b16 %v967, %v967
      %v1045 = vpack.c.b8 %v1044, %v1044
      %v1046 = vpack.c.b16 %v968, %v968
      %v1047 = vpack.c.b8 %v1046, %v1046
      %v1048 = vpack.c.b16 %v969, %v969
      %v1049 = vpack.c.b8 %v1048, %v1048
      %v1050 = vpack.c.b16 %v970, %v970
      %v1051 = vpack.c.b8 %v1050, %v1050
      %v1052 = vpack.c.b16 %v971, %v971
      %v1053 = vpack.c.b8 %v1052, %v1052
      %v1054 = vpack.c.b16 %v972, %v972
      %v1055 = vpack.c.b8 %v1054, %v1054
      %v1056 = vpack.c.b16 %v973, %v973
      %v1057 = vpack.c.b8 %v1056, %v1056
      %v1058 = vpack.c.b16 %v974, %v974
      %v1059 = vpack.c.b8 %v1058, %v1058
      %v1060 = vpack.c.b16 %v975, %v975
      %v1061 = vpack.c.b8 %v1060, %v1060
      %v1062 = vpack.c.b16 %v976, %v976
      %v1063 = vpack.c.b8 %v1062, %v1062
      %v1064 = vpack.c.b16 %v977, %v977
      %v1065 = vpack.c.b8 %v1064, %v1064
      %v1066 = vpack.c.b16 %v978, %v978
      %v1067 = vpack.c.b8 %v1066, %v1066
      %v1068 = vpack.c.b16 %v979, %v979
      %v1069 = vpack.c.b8 %v1068, %v1068
      %v1070 = vpack.c.b16 %v980, %v980
      %v1071 = vpack.c.b8 %v1070, %v1070
      %v1072 = vpack.c.b16 %v981, %v981
      %v1073 = vpack.c.b8 %v1072, %v1072
      %v1074 = vpack.c.b16 %v982, %v982
      %v1075 = vpack.c.b8 %v1074, %v1074
      %v1076 = vpack.c.b16 %v983, %v983
      %v1077 = vpack.c.b8 %v1076, %v1076
      %v1078 = vpack.c.b16 %v984, %v984
      %v1079 = vpack.c.b8 %v1078, %v1078
      %v1080 = vpack.c.b16 %v985, %v985
      %v1081 = vpack.c.b8 %v1080, %v1080
      %v1082 = vpack.c.b16 %v986, %v986
      %v1083 = vpack.c.b8 %v1082, %v1082
      %v1084 = vpack.c.b16 %v987, %v987
      %v1085 = vpack.c.b8 %v1084, %v1084
      %v1086 = vpack.c.b16 %v988, %v988
      %v1087 = vpack.c.b8 %v1086, %v1086
      %v1088 = vpack.c.b16 %v989, %v989
      %v1089 = vpack.c.b8 %v1088, %v1088
      %v1090 = vpack.c.b16 %v990, %v990
      %v1091 = vpack.c.b8 %v1090, %v1090
      %v1092 = vpack.c.b16 %v991, %v991
      %v1093 = vpack.c.b8 %v1092, %v1092
      %v1094 = vpack.c.b16 %v992, %v992
      %v1095 = vpack.c.b8 %v1094, %v1094
      %v1096 = vpack.c.b16 %v993, %v993
      %v1097 = vpack.c.b8 %v1096, %v1096
      %v1098 = vpack.c.b16 %v994, %v994
      %v1099 = vpack.c.b8 %v1098, %v1098
      %v1100 = vpack.c.b16 %v995, %v995
      %v1101 = vpack.c.b8 %v1100, %v1100
      %v1102 = vpack.c.b16 %v996, %v996
      %v1103 = vpack.c.b8 %v1102, %v1102
      %v1104 = vpack.c.b16 %v997, %v997
      %v1105 = vpack.c.b8 %v1104, %v1104
      %v1106 = vpack.c.b16 %v998, %v998
      %v1107 = vpack.c.b8 %v1106, %v1106
      %v1108 = vpack.c.b16 %v999, %v999
      %v1109 = vpack.c.b8 %v1108, %v1108
      %v1110 = vpack.c.b16 %v1000, %v1000
      %v1111 = vpack.c.b8 %v1110, %v1110
      %v1112 = vpack.c.b16 %v1001, %v1001
      %v1113 = vpack.c.b8 %v1112, %v1112
      %v1114 = vpack.c.b16 %v1002, %v1002
      %v1115 = vpack.c.b8 %v1114, %v1114
      %v1116 = vpack.c.b16 %v1003, %v1003
      %v1117 = vpack.c.b8 %v1116, %v1116
      %v1118 = vpack.c.b16 %v1004, %v1004
      %v1119 = vpack.c.b8 %v1118, %v1118
      %v1120 = vpack.c.b16 %v1005, %v1005
      %v1121 = vpack.c.b8 %v1120, %v1120
      %v1122 = vpack.c.b16 %v1006, %v1006
      %v1123 = vpack.c.b8 %v1122, %v1122
      %v1124 = vpack.c.b16 %v1007, %v1007
      %v1125 = vpack.c.b8 %v1124, %v1124
      %v1126 = vpack.c.b16 %v1008, %v1008
      %v1127 = vpack.c.b8 %v1126, %v1126
      %v1128 = vpack.c.b16 %v1009, %v1009
      %v1129 = vpack.c.b8 %v1128, %v1128
      %v1130 = vpack.c.b16 %v1010, %v1010
      %v1131 = vpack.c.b8 %v1130, %v1130
      %v1132 = vpack.c.b16 %v1011, %v1011
      %v1133 = vpack.c.b8 %v1132, %v1132
      %v1134 = vpack.c.b16 %v1012, %v1012
      %v1135 = vpack.c.b8 %v1134, %v1134
      %v1136 = vpack.c.b16 %v1013, %v1013
      %v1137 = vpack.c.b8 %v1136, %v1136
      %v1138 = vpack.c.b16 %v1014, %v1014
      %v1139 = vpack.c.b8 %v1138, %v1138
      %v1140 = vpack.c.b16 %v1015, %v1015
      %v1141 = vpack.c.b8 %v1140, %v1140
      %v1142 = vpack.c.b16 %v1016, %v1016
      %v1143 = vpack.c.b8 %v1142, %v1142
      %v1144 = vpack.c.b16 %v1017, %v1017
      %v1145 = vpack.c.b8 %v1144, %v1144
      %1146 = vst [vmem:[%s223] sm:$0x3] %v1019
      %1147 = vst [vmem:[%s223 + $0x2] sm:$0x3] %v1021
      %1148 = vst [vmem:[%s223 + $0x4] sm:$0x3] %v1023
      %1149 = vst [vmem:[%s223 + $0x6] sm:$0x3] %v1025
      %1150 = vst [vmem:[%s223 + $0x8] sm:$0x3] %v1027
      %1151 = vst [vmem:[%s223 + $0xa] sm:$0x3] %v1029
      %1152 = vst [vmem:[%s223 + $0xc] sm:$0x3] %v1031
      %1153 = vst [vmem:[%s223 + $0xe] sm:$0x3] %v1033
      %1154 = vst [vmem:[%s223 + $0x10] sm:$0x3] %v1035
      %1155 = vst [vmem:[%s223 + $0x12] sm:$0x3] %v1037
      %1156 = vst [vmem:[%s223 + $0x14] sm:$0x3] %v1039
      %1157 = vst [vmem:[%s223 + $0x16] sm:$0x3] %v1041
      %1158 = vst [vmem:[%s223 + $0x18] sm:$0x3] %v1043
      %1159 = vst [vmem:[%s223 + $0x1a] sm:$0x3] %v1045
      %1160 = vst [vmem:[%s223 + $0x1c] sm:$0x3] %v1047
      %1161 = vst [vmem:[%s223 + $0x1e] sm:$0x3] %v1049
      %1162 = vst [vmem:[%s223 + $0x20] sm:$0x3] %v1051
      %1163 = vst [vmem:[%s223 + $0x22] sm:$0x3] %v1053
      %1164 = vst [vmem:[%s223 + $0x24] sm:$0x3] %v1055
      %1165 = vst [vmem:[%s223 + $0x26] sm:$0x3] %v1057
      %1166 = vst [vmem:[%s223 + $0x28] sm:$0x3] %v1059
      %1167 = vst [vmem:[%s223 + $0x2a] sm:$0x3] %v1061
      %1168 = vst [vmem:[%s223 + $0x2c] sm:$0x3] %v1063
      %1169 = vst [vmem:[%s223 + $0x2e] sm:$0x3] %v1065
      %1170 = vst [vmem:[%s223 + $0x30] sm:$0x3] %v1067
      %1171 = vst [vmem:[%s223 + $0x32] sm:$0x3] %v1069
      %1172 = vst [vmem:[%s223 + $0x34] sm:$0x3] %v1071
      %1173 = vst [vmem:[%s223 + $0x36] sm:$0x3] %v1073
      %1174 = vst [vmem:[%s223 + $0x38] sm:$0x3] %v1075
      %1175 = vst [vmem:[%s223 + $0x3a] sm:$0x3] %v1077
      %1176 = vst [vmem:[%s223 + $0x3c] sm:$0x3] %v1079
      %1177 = vst [vmem:[%s223 + $0x3e] sm:$0x3] %v1081
      %1178 = vst [vmem:[%s223 + $0x40] sm:$0x3] %v1083
      %1179 = vst [vmem:[%s223 + $0x42] sm:$0x3] %v1085
      %1180 = vst [vmem:[%s223 + $0x44] sm:$0x3] %v1087
      %1181 = vst [vmem:[%s223 + $0x46] sm:$0x3] %v1089
      %1182 = vst [vmem:[%s223 + $0x48] sm:$0x3] %v1091
      %1183 = vst [vmem:[%s223 + $0x4a] sm:$0x3] %v1093
      %1184 = vst [vmem:[%s223 + $0x4c] sm:$0x3] %v1095
      %1185 = vst [vmem:[%s223 + $0x4e] sm:$0x3] %v1097
      %1186 = vst [vmem:[%s223 + $0x50] sm:$0x3] %v1099
      %1187 = vst [vmem:[%s223 + $0x52] sm:$0x3] %v1101
      %1188 = vst [vmem:[%s223 + $0x54] sm:$0x3] %v1103
      %1189 = vst [vmem:[%s223 + $0x56] sm:$0x3] %v1105
      %1190 = vst [vmem:[%s223 + $0x58] sm:$0x3] %v1107
      %1191 = vst [vmem:[%s223 + $0x5a] sm:$0x3] %v1109
      %1192 = vst [vmem:[%s223 + $0x5c] sm:$0x3] %v1111
      %1193 = vst [vmem:[%s223 + $0x5e] sm:$0x3] %v1113
      %1194 = vst [vmem:[%s223 + $0x60] sm:$0x3] %v1115
      %1195 = vst [vmem:[%s223 + $0x62] sm:$0x3] %v1117
      %1196 = vst [vmem:[%s223 + $0x64] sm:$0x3] %v1119
      %1197 = vst [vmem:[%s223 + $0x66] sm:$0x3] %v1121
      %1198 = vst [vmem:[%s223 + $0x68] sm:$0x3] %v1123
      %1199 = vst [vmem:[%s223 + $0x6a] sm:$0x3] %v1125
      %1200 = vst [vmem:[%s223 + $0x6c] sm:$0x3] %v1127
      %1201 = vst [vmem:[%s223 + $0x6e] sm:$0x3] %v1129
      %1202 = vst [vmem:[%s223 + $0x70] sm:$0x3] %v1131
      %1203 = vst [vmem:[%s223 + $0x72] sm:$0x3] %v1133
      %1204 = vst [vmem:[%s223 + $0x74] sm:$0x3] %v1135
      %1205 = vst [vmem:[%s223 + $0x76] sm:$0x3] %v1137
      %1206 = vst [vmem:[%s223 + $0x78] sm:$0x3] %v1139
      %1207 = vst [vmem:[%s223 + $0x7a] sm:$0x3] %v1141
      %1208 = vst [vmem:[%s223 + $0x7c] sm:$0x3] %v1143
      %1209 = vst [vmem:[%s223 + $0x7e] sm:$0x3] %v1145
      %s1210 = smul.u32 64, %s18
      %p1211 = scmp.lt.s32.totalorder %s1210, 127
      %s1212 = scalar_select %p1211, %s1210, 127
      %p1213 = scmp.lt.s32.totalorder %s19, 0
      %s1214 = scalar_select %p1213, %s19, 0
      %s1215 = sadd.s32 %s1214, %s1212
      %s1216 = smul.addr %s1215, 2
      %s1217 = scalar_lea.vmem %s3, %s1216
      // Predicated region
      $region33: #{quantized_conv3d.1} parent=31 // pred_check
        %p1218 = pneg %p124
      $region34: #{quantized_conv3d.1} parent=31 // pred_check_branch
        %1220 = sbr.rel (%p1218) target = $region36
      $region35: #{quantized_conv3d.1} parent=31 // pred_region
        %s1221 = smul.u32 64, %s18
      $region36: #{quantized_conv3d.1} parent=31 // pred_fallthru
        _
    $region32: #{quantized_conv3d.1} parent=5 // pred_fallthru
      _
    %p1222 = scmp.le.s32.totalorder 2, %s9
    // Predicated region
    $region37: #{quantized_conv3d.1} parent=5 // pred_check
      %p1223 = pneg %p1222
    $region38: #{quantized_conv3d.1} parent=5 // pred_check_branch
      %1225 = sbr.rel (%p1223) target = $region40
    $region39: #{quantized_conv3d.1} parent=5 // pred_region
      %s1226 = ssub.s32 %s9, 2
      // Predicated region
      $region41: #{quantized_conv3d.1} parent=39 // pred_check
        %p1227 = pneg %p130
      $region42: #{quantized_conv3d.1} parent=39 // pred_check_branch
        %1229 = sbr.rel (%p1227) target = $region44
      $region43: #{quantized_conv3d.1} parent=39 // pred_region
        %s1230 = smul.u32 64, %s20
        %p1231 = scmp.lt.s32.totalorder %s1230, 127
        %s1232 = scalar_select %p1231, %s1230, 127
        %p1233 = scmp.lt.s32.totalorder %s21, 0
        %s1234 = scalar_select %p1233, %s21, 0
        %s1235 = sadd.s32 %s1234, %s1232
        %s1236 = smul.addr %s1235, 2
        %s1237 = scalar_lea.vmem %s3, %s1236
      $region44: #{quantized_conv3d.1} parent=39 // pred_fallthru
        _
    $region40: #{quantized_conv3d.1} parent=5 // pred_fallthru
      _
  $region6: #{quantized_conv3d.1} parent=0 // loop_footer
    %s13 = sadd.s32 1, %s9
  $region7: #{quantized_conv3d.1} parent=0 // loop_footer_branch
    %8 = sbr.rel target = $region3
  $region8: #{quantized_conv3d.1} parent=0 // loop_exit
    _

</llo_original>
